<compile_context>
chip_gen: v6e
topology: v6e:2x2x1
jax: 0.10.0
libtpu: 0.0.40
codegen_flags: <defaults>
</compile_context>

<pallas_src>
import jax
import jax.numpy as jnp
from jax.experimental import pallas as pl
from jax.experimental.pallas import tpu as pltpu

IN_SIZE = 2
HIDDEN_SIZE = 3
OUT_SIZE = 1

LANE = 128  # TPU lane width


def _sigmoid(x):
    # exp lowers to the EUP slot; exact divide keeps 1e-5 accuracy.
    return 1.0 / (1.0 + jnp.exp(-x))


def mlp_kernel(w1_ref, w2_ref, xT_ref, o_ref):
    # xT_ref: (2, TB) f32 in VMEM, batch on lanes.
    # w1_ref: (2, 3) f32 in SMEM; w2_ref: (3, 1) f32 in SMEM (scalar reads).
    x = xT_ref[...]
    x0 = x[0:1, :]  # (1, TB)
    x1 = x[1:2, :]  # (1, TB)

    # Hidden layer (3 units) + output layer, fully unrolled as VPU FMAs with
    # SMEM weight scalars; accumulate the output pre-activation directly.
    z3 = jnp.zeros_like(x0)
    for h in range(HIDDEN_SIZE):
        z_h = x0 * w1_ref[0, h] + x1 * w1_ref[1, h]
        a_h = _sigmoid(z_h)
        z3 = z3 + a_h * w2_ref[h, 0]

    o_ref[...] = _sigmoid(z3)  # (1, TB), lane-dense store


def _round_up(n, m):
    return ((n + m - 1) // m) * m


def neural_network_forward(x, w1, w2, *, block_b=1024):
    """x: (B, 2) f32, w1: (2, 3) f32, w2: (3, 1) f32 -> (B, 1) f32."""
    B = x.shape[0]
    block_b = _round_up(max(block_b, LANE), LANE)

    # Batch on the lane axis; tile size = min(block_b, batch rounded to a lane multiple).
    tb = min(block_b, _round_up(B, LANE))
    b_pad = _round_up(B, tb)

    xT = jnp.transpose(x.astype(jnp.float32))          # (2, B)
    if b_pad != B:
        xT = jnp.pad(xT, ((0, 0), (0, b_pad - B)))      # (2, b_pad)

    grid = (b_pad // tb,)

    out_t = pl.pallas_call(
        mlp_kernel,
        out_shape=jax.ShapeDtypeStruct((OUT_SIZE, b_pad), jnp.float32),
        grid_spec=pl.GridSpec(
            grid=grid,
            in_specs=[
                # Tiny weights live entirely in SMEM (scalar access, no VMEM padding).
                pl.BlockSpec(memory_space=pltpu.MemorySpace.SMEM),
                pl.BlockSpec(memory_space=pltpu.MemorySpace.SMEM),
                # X^T tiled along the batch (lane) axis.
                pl.BlockSpec((IN_SIZE, tb), lambda i: (0, i)),
            ],
            out_specs=pl.BlockSpec((OUT_SIZE, tb), lambda i: (0, i)),
        ),
        compiler_params=pltpu.CompilerParams(
            dimension_semantics=("parallel",),
        ),
    )(w1.astype(jnp.float32), w2.astype(jnp.float32), xT)

    return out_t[:, :B].T  # (B, 1)


def _reference(x, w1, w2):
    z2 = 1.0 / (1.0 + jnp.exp(-(x @ w1)))
    return 1.0 / (1.0 + jnp.exp(-(z2 @ w2)))


if __name__ == "__main__":
    key = jax.random.PRNGKey(0)
    k_w1, k_w2, k_x1, k_x2 = jax.random.split(key, 4)

    # Same parameter shapes as torch.randn in Neural_Network.__init__.
    weight1 = jax.random.normal(k_w1, (IN_SIZE, HIDDEN_SIZE), jnp.float32)
    weight2 = jax.random.normal(k_w2, (HIDDEN_SIZE, OUT_SIZE), jnp.float32)

    # Small scaled input (the original script divides X by its max -> values in [0, 1]).
    batch = 4
    x_small = jax.random.uniform(k_x1, (batch, IN_SIZE), jnp.float32)

    out = jax.block_until_ready(neural_network_forward(x_small, weight1, weight2))
    ref = _reference(x_small, weight1, weight2)
    assert out.shape == (batch, OUT_SIZE)
    assert jnp.allclose(out, ref, atol=1e-5, rtol=1e-5)

    # Exercise the tiled / padded path (grid > 1, batch not a lane multiple).
    batch2 = 300
    x_big = jax.random.uniform(k_x2, (batch2, IN_SIZE), jnp.float32)
    out2 = jax.block_until_ready(
        neural_network_forward(x_big, weight1, weight2, block_b=128)
    )
    ref2 = _reference(x_big, weight1, weight2)
    assert out2.shape == (batch2, OUT_SIZE)
    assert jnp.allclose(out2, ref2, atol=1e-5, rtol=1e-5)

    # TODO(synk): backward()/train() (manual SGD update) not implemented; spec is forward-only.
    print("KERNEL_OK")
</pallas_src>

<mosaic_0001>
module attributes {stable_mosaic.version = 11 : i64} {
  func.func @mlp_kernel(%arg0: i32, %arg1: memref<2x3xf32, #tpu.memory_space<smem>>, %arg2: memref<3x1xf32, #tpu.memory_space<smem>>, %arg3: memref<2x128xf32, #tpu.memory_space<vmem>>, %arg4: memref<1x128xf32, #tpu.memory_space<vmem>>) attributes {dimension_semantics = [#tpu.dimension_semantics<parallel>], iteration_bounds = array<i64: 1>, scalar_prefetch = 0 : i64, scratch_operands = 0 : i64, tpu.core_type = #tpu.core_type<tc>, window_params = [{transform_indices = @transform_0, window_bounds = array<i64: 2, 3>}, {transform_indices = @transform_1, window_bounds = array<i64: 3, 1>}, {transform_indices = @transform_2, window_bounds = array<i64: 2, 128>}, {transform_indices = @transform_3, window_bounds = array<i64: 1, 128>}]} {
    %c0 = arith.constant 0 : index
    %c0_0 = arith.constant 0 : index
    %0 = vector.load %arg3[%c0, %c0_0] : memref<2x128xf32, #tpu.memory_space<vmem>>, vector<2x128xf32>
    %1 = vector.extract_strided_slice %0 {offsets = [0, 0], sizes = [1, 128], strides = [1, 1]} : vector<2x128xf32> to vector<1x128xf32>
    %2 = vector.extract_strided_slice %0 {offsets = [1, 0], sizes = [1, 128], strides = [1, 1]} : vector<2x128xf32> to vector<1x128xf32>
    %cst = arith.constant 0.000000e+00 : f32
    %3 = vector.broadcast %cst : f32 to vector<1x128xf32>
    %c0_1 = arith.constant 0 : index
    %c0_2 = arith.constant 0 : index
    %4 = memref.load %arg1[%c0_1, %c0_2] : memref<2x3xf32, #tpu.memory_space<smem>>
    %5 = vector.broadcast %4 : f32 to vector<1x128xf32>
    %6 = arith.mulf %1, %5 : vector<1x128xf32>
    %c1 = arith.constant 1 : index
    %c0_3 = arith.constant 0 : index
    %7 = memref.load %arg1[%c1, %c0_3] : memref<2x3xf32, #tpu.memory_space<smem>>
    %8 = vector.broadcast %7 : f32 to vector<1x128xf32>
    %9 = arith.mulf %2, %8 : vector<1x128xf32>
    %10 = arith.addf %6, %9 : vector<1x128xf32>
    %cst_4 = arith.constant 0.000000e+00 : f32
    %11 = vector.broadcast %cst_4 : f32 to vector<1x128xf32>
    %12 = arith.subf %11, %10 : vector<1x128xf32>
    %13 = math.exp %12 : vector<1x128xf32>
    %cst_5 = arith.constant 1.000000e+00 : f32
    %14 = vector.broadcast %cst_5 : f32 to vector<1x128xf32>
    %15 = arith.addf %14, %13 : vector<1x128xf32>
    %cst_6 = arith.constant 1.000000e+00 : f32
    %16 = vector.broadcast %cst_6 : f32 to vector<1x128xf32>
    %17 = arith.divf %16, %15 : vector<1x128xf32>
    %c0_7 = arith.constant 0 : index
    %c0_8 = arith.constant 0 : index
    %18 = memref.load %arg2[%c0_7, %c0_8] : memref<3x1xf32, #tpu.memory_space<smem>>
    %19 = vector.broadcast %18 : f32 to vector<1x128xf32>
    %20 = arith.mulf %17, %19 : vector<1x128xf32>
    %21 = arith.addf %3, %20 : vector<1x128xf32>
    %c0_9 = arith.constant 0 : index
    %c1_10 = arith.constant 1 : index
    %22 = memref.load %arg1[%c0_9, %c1_10] : memref<2x3xf32, #tpu.memory_space<smem>>
    %23 = vector.broadcast %22 : f32 to vector<1x128xf32>
    %24 = arith.mulf %1, %23 : vector<1x128xf32>
    %c1_11 = arith.constant 1 : index
    %c1_12 = arith.constant 1 : index
    %25 = memref.load %arg1[%c1_11, %c1_12] : memref<2x3xf32, #tpu.memory_space<smem>>
    %26 = vector.broadcast %25 : f32 to vector<1x128xf32>
    %27 = arith.mulf %2, %26 : vector<1x128xf32>
    %28 = arith.addf %24, %27 : vector<1x128xf32>
    %cst_13 = arith.constant 0.000000e+00 : f32
    %29 = vector.broadcast %cst_13 : f32 to vector<1x128xf32>
    %30 = arith.subf %29, %28 : vector<1x128xf32>
    %31 = math.exp %30 : vector<1x128xf32>
    %cst_14 = arith.constant 1.000000e+00 : f32
    %32 = vector.broadcast %cst_14 : f32 to vector<1x128xf32>
    %33 = arith.addf %32, %31 : vector<1x128xf32>
    %cst_15 = arith.constant 1.000000e+00 : f32
    %34 = vector.broadcast %cst_15 : f32 to vector<1x128xf32>
    %35 = arith.divf %34, %33 : vector<1x128xf32>
    %c1_16 = arith.constant 1 : index
    %c0_17 = arith.constant 0 : index
    %36 = memref.load %arg2[%c1_16, %c0_17] : memref<3x1xf32, #tpu.memory_space<smem>>
    %37 = vector.broadcast %36 : f32 to vector<1x128xf32>
    %38 = arith.mulf %35, %37 : vector<1x128xf32>
    %39 = arith.addf %21, %38 : vector<1x128xf32>
    %c0_18 = arith.constant 0 : index
    %c2 = arith.constant 2 : index
    %40 = memref.load %arg1[%c0_18, %c2] : memref<2x3xf32, #tpu.memory_space<smem>>
    %41 = vector.broadcast %40 : f32 to vector<1x128xf32>
    %42 = arith.mulf %1, %41 : vector<1x128xf32>
    %c1_19 = arith.constant 1 : index
    %c2_20 = arith.constant 2 : index
    %43 = memref.load %arg1[%c1_19, %c2_20] : memref<2x3xf32, #tpu.memory_space<smem>>
    %44 = vector.broadcast %43 : f32 to vector<1x128xf32>
    %45 = arith.mulf %2, %44 : vector<1x128xf32>
    %46 = arith.addf %42, %45 : vector<1x128xf32>
    %cst_21 = arith.constant 0.000000e+00 : f32
    %47 = vector.broadcast %cst_21 : f32 to vector<1x128xf32>
    %48 = arith.subf %47, %46 : vector<1x128xf32>
    %49 = math.exp %48 : vector<1x128xf32>
    %cst_22 = arith.constant 1.000000e+00 : f32
    %50 = vector.broadcast %cst_22 : f32 to vector<1x128xf32>
    %51 = arith.addf %50, %49 : vector<1x128xf32>
    %cst_23 = arith.constant 1.000000e+00 : f32
    %52 = vector.broadcast %cst_23 : f32 to vector<1x128xf32>
    %53 = arith.divf %52, %51 : vector<1x128xf32>
    %c2_24 = arith.constant 2 : index
    %c0_25 = arith.constant 0 : index
    %54 = memref.load %arg2[%c2_24, %c0_25] : memref<3x1xf32, #tpu.memory_space<smem>>
    %55 = vector.broadcast %54 : f32 to vector<1x128xf32>
    %56 = arith.mulf %53, %55 : vector<1x128xf32>
    %57 = arith.addf %39, %56 : vector<1x128xf32>
    %cst_26 = arith.constant 0.000000e+00 : f32
    %58 = vector.broadcast %cst_26 : f32 to vector<1x128xf32>
    %59 = arith.subf %58, %57 : vector<1x128xf32>
    %60 = math.exp %59 : vector<1x128xf32>
    %cst_27 = arith.constant 1.000000e+00 : f32
    %61 = vector.broadcast %cst_27 : f32 to vector<1x128xf32>
    %62 = arith.addf %61, %60 : vector<1x128xf32>
    %cst_28 = arith.constant 1.000000e+00 : f32
    %63 = vector.broadcast %cst_28 : f32 to vector<1x128xf32>
    %64 = arith.divf %63, %62 : vector<1x128xf32>
    %c0_29 = arith.constant 0 : index
    %c0_30 = arith.constant 0 : index
    %65 = vector.load %arg4[%c0_29, %c0_30] : memref<1x128xf32, #tpu.memory_space<vmem>>, vector<1x128xf32>
    tpu.vector_store %arg4[%c0_29, %c0_30], %64 {strides = array<i32>} : memref<1x128xf32, #tpu.memory_space<vmem>>, vector<1x128xf32>,
    return
  }
  func.func @transform_0(%arg0: i32) -> (i32, i32) {
    %c0_i32 = arith.constant 0 : i32
    %c0_i32_0 = arith.constant 0 : i32
    %c0_i32_1 = arith.constant 0 : i32
    return %c0_i32, %c0_i32_0 : i32, i32
  }
  func.func @transform_1(%arg0: i32) -> (i32, i32) {
    %c0_i32 = arith.constant 0 : i32
    %c0_i32_0 = arith.constant 0 : i32
    %c0_i32_1 = arith.constant 0 : i32
    return %c0_i32, %c0_i32_0 : i32, i32
  }
  func.func @transform_2(%arg0: i32) -> (i32, i32) {
    %c0_i32 = arith.constant 0 : i32
    %c0_i32_0 = arith.constant 0 : i32
    return %c0_i32, %arg0 : i32, i32
  }
  func.func @transform_3(%arg0: i32) -> (i32, i32) {
    %c0_i32 = arith.constant 0 : i32
    %c0_i32_0 = arith.constant 0 : i32
    return %c0_i32, %arg0 : i32, i32
  }
}

</mosaic_0001>

<llo_original>
// kernel: tpu_custom_call.1
$region0: #{tpu_custom_call.1}
  #allocation0 [shape = 'u32[]', space=smem, size = 0x4, offset = 0x4, fixed_abs, tag = 'smem constant byte address 0x4 - core index']
  #allocation1 [shape = 'u32[144,128]{1,0:T(1,128)}', space=vmem, size = 0x12000, scoped, tag = 'internal scratch']
  %s0 = inlined_call_operand.vmem [shape: f32[2,3], index: 0, kind: input, shape index: {}]
  %s1 = inlined_call_operand.vmem [shape: f32[3,1], index: 1, kind: input, shape index: {}]
  %s2 = inlined_call_operand.vmem [shape: f32[2,128], index: 2, kind: input, shape index: {}]
  %s3 = inlined_call_operand.hbm [shape: f32[1,128], index: 3, kind: output, shape index: {}]
  %s4 = sld [smem:[#allocation0]]
  $region30: #{tpu_custom_call.1} parent=0
    _
  %s6 = ssub.s32 1, %s4
  %s7 = scalar_select 0, %s6, %s4
  $region1: #{tpu_custom_call.1} parent=0
    #allocation2 [shape = 'u8[1024]{0}', space=smem, size = 0x400, scoped, tag = 'input window, operand 0, single buffered']
    #allocation3 [shape = 's32[1]{0}', space=sflag, size = 0x4, scoped, tag = 'scoped memory for tpu_custom_call.1']
    #allocation4 [shape = 's32[1]{0}', space=sflag, size = 0x4, scoped, tag = 'scoped memory for tpu_custom_call.1']
    #allocation5 [shape = 'u8[2048]{0}', space=smem, size = 0x800, scoped, tag = 'input window, operand 1, single buffered']
    #allocation6 [shape = 's32[1]{0}', space=sflag, size = 0x4, scoped, tag = 'scoped memory for tpu_custom_call.1']
    #allocation7 [shape = 'u8[512]{0}', space=vmem, size = 0x400, scoped, tag = 'output window, operand 0, single buffered']
    %8 = vsyncpa [#allocation4], 0
    %9 = vsyncpa [#allocation6], 0
    %10 = vsyncpa [#allocation3], 0
    // Predicated region
    $region2: #{tpu_custom_call.1} parent=1 // pred_check
      _
    $region3: #{tpu_custom_call.1} parent=1 // pred_check_branch
      %12 = sbr.rel (0) target = $region5
    $region4: #{tpu_custom_call.1} parent=1 // pred_region
      %s14 = ssub.s32 32, 32
      %15 = vsyncadd [#allocation4], %s14
      %s17 = sshll.u32 %s0, 4
      %s18 = int_to_ptr.vmem [resolvable:$true] %s17
      %20 = dma.vmem_to_smem %s18, 32, [#allocation2], [#allocation4]
    $region5: #{tpu_custom_call.1} parent=1 // pred_fallthru
      _
    // Predicated region
    $region6: #{tpu_custom_call.1} parent=1 // pred_check
      _
    $region7: #{tpu_custom_call.1} parent=1 // pred_check_branch
      %22 = sbr.rel (0) target = $region9
    $region8: #{tpu_custom_call.1} parent=1 // pred_region
      %s24 = ssub.s32 64, 64
      %25 = vsyncadd [#allocation6], %s24
      %s27 = sshll.u32 %s1, 4
      %s28 = int_to_ptr.vmem [resolvable:$true] %s27
      %30 = dma.vmem_to_smem %s28, 64, [#allocation5], [#allocation6]
    $region9: #{tpu_custom_call.1} parent=1 // pred_fallthru
      _
    // Predicated region
    $region10: #{tpu_custom_call.1} parent=1 // pred_check
      _
    $region11: #{tpu_custom_call.1} parent=1 // pred_check_branch
      %32 = sbr.rel (0) target = $region13
    $region12: #{tpu_custom_call.1} parent=1 // pred_region
      _
    $region13: #{tpu_custom_call.1} parent=1 // pred_fallthru
      _
    // Predicated region
    $region14: #{tpu_custom_call.1} parent=1 // pred_check
      _
    $region15: #{tpu_custom_call.1} parent=1 // pred_check_branch
      %34 = sbr.rel (0) target = $region17
    $region16: #{tpu_custom_call.1} parent=1 // pred_region
      %35 = dma.done [#allocation4], 32
    $region17: #{tpu_custom_call.1} parent=1 // pred_fallthru
      _
    // Predicated region
    $region18: #{tpu_custom_call.1} parent=1 // pred_check
      _
    $region19: #{tpu_custom_call.1} parent=1 // pred_check_branch
      %37 = sbr.rel (0) target = $region21
    $region20: #{tpu_custom_call.1} parent=1 // pred_region
      %38 = dma.done [#allocation6], 64
    $region21: #{tpu_custom_call.1} parent=1 // pred_fallthru
      _
    %39 = sfence
    %v40 = vld [vmem:[%s2] sm:$0x3]
    %s41 = sld [smem:[#allocation2]]
    %v42 = vstv %s41
    %v43 = vmul.f32 %v40, %v42
    %s44 = sld [smem:[#allocation2 + $0x80]]
    %v45 = vstv %s44
    %v46 = vmul.f32 %v40, %v45
    %v48 = vrot.slane %v46, 1
    %v50 = vadd.f32 %v43, %v48
    %v51 = vsub.f32 0.0, %v50
    %v52 = vmul.f32 %v51, 1.442695
    %v53 = vpow.pop %v52
    %v54 = vadd.f32 %v53, 1.0
    %v55 = vrcp.pop %v54
    %v56 = vmul.f32 1.0, %v55
    %s57 = sld [smem:[#allocation5]]
    %v58 = vstv %s57
    %v59 = vmul.f32 %v56, %v58
    %v60 = vadd.f32 %v59, 0.0
    %s61 = sld [smem:[#allocation2 + $0x1]]
    %v62 = vstv %s61
    %v63 = vmul.f32 %v40, %v62
    %s64 = sld [smem:[#allocation2 + $0x81]]
    %v65 = vstv %s64
    %v66 = vmul.f32 %v40, %v65
    %v68 = vrot.slane %v66, 1
    %v70 = vadd.f32 %v63, %v68
    %v71 = vsub.f32 0.0, %v70
    %v72 = vmul.f32 %v71, 1.442695
    %v73 = vpow.pop %v72
    %v74 = vadd.f32 %v73, 1.0
    %v75 = vrcp.pop %v74
    %v76 = vmul.f32 1.0, %v75
    %s77 = sld [smem:[#allocation5 + $0x80]]
    %v78 = vstv %s77
    %v79 = vmul.f32 %v76, %v78
    %v80 = vadd.f32 %v60, %v79
    %s81 = sld [smem:[#allocation2 + $0x2]]
    %v82 = vstv %s81
    %v83 = vmul.f32 %v40, %v82
    %s84 = sld [smem:[#allocation2 + $0x82]]
    %v85 = vstv %s84
    %v86 = vmul.f32 %v40, %v85
    %v88 = vrot.slane %v86, 1
    %v90 = vadd.f32 %v83, %v88
    %v91 = vsub.f32 0.0, %v90
    %v92 = vmul.f32 %v91, 1.442695
    %v93 = vpow.pop %v92
    %v94 = vadd.f32 %v93, 1.0
    %v95 = vrcp.pop %v94
    %v96 = vmul.f32 1.0, %v95
    %s97 = sld [smem:[#allocation5 + $0x100]]
    %v98 = vstv %s97
    %v99 = vmul.f32 %v96, %v98
    %v100 = vadd.f32 %v80, %v99
    %v101 = vsub.f32 0.0, %v100
    %v102 = vmul.f32 %v101, 1.442695
    %v103 = vpow.pop %v102
    %v104 = vadd.f32 %v103, 1.0
    %v105 = vrcp.pop %v104
    %v106 = vmul.f32 1.0, %v105
    %107 = vst [vmem:[#allocation7] sm:$0x1] %v106
    // Predicated region
    $region22: #{tpu_custom_call.1} parent=1 // pred_check
      _
    $region23: #{tpu_custom_call.1} parent=1 // pred_check_branch
      %109 = sbr.rel (0) target = $region25
    $region24: #{tpu_custom_call.1} parent=1 // pred_region
      %s111 = ssub.s32 16, 16
      %112 = vsyncadd [#allocation3], %s111
      %s114 = sshll.u32 [#allocation7], 4
      %s115 = int_to_ptr.vmem [resolvable:$true] %s114
      %117 = dma.vmem_to_hbm [thread:$0]  %s115, 16, %s3, [#allocation3]
    $region25: #{tpu_custom_call.1} parent=1 // pred_fallthru
      _
    // Predicated region
    $region26: #{tpu_custom_call.1} parent=1 // pred_check
      _
    $region27: #{tpu_custom_call.1} parent=1 // pred_check_branch
      %119 = sbr.rel (0) target = $region29
    $region28: #{tpu_custom_call.1} parent=1 // pred_region
      %120 = dma.done [#allocation3], 16
    $region29: #{tpu_custom_call.1} parent=1 // pred_fallthru
      _
    %121 = vsyncpa [#allocation3], 1
    %122 = vsyncpa [#allocation4], 1
    %123 = vsyncpa [#allocation6], 1

</llo_original>
